<compile_context>
chip_gen: v7x
topology: tpu7x:2x2x1
jax: 0.10.0
libtpu: 0.0.40
codegen_flags: <defaults>
</compile_context>

<pallas_src>
import math
from functools import partial

import jax
import jax.numpy as jnp
from jax import lax
from jax.experimental import pallas as pl
from jax.experimental.pallas import tpu as pltpu


_VMEM_LIMIT_BYTES = 48 * 1024 * 1024   # explicit scoped-VMEM limit (fits all gens)
_VMEM_BLOCK_BUDGET = 36 * 1024 * 1024  # size blocks against this, leave headroom


def _attn_kernel(q_ref, k_ref, v_ref, o_ref, m_sc, l_sc, acc_sc, *, logit_scale):
    # q_ref/o_ref: (bblk, C, T), k_ref/v_ref: (bblk, C, Tk); lane axis = T / Tk.
    kv = pl.program_id(1)

    @pl.when(kv == 0)
    def _init():
        m_sc[...] = jnp.full(m_sc.shape, -jnp.inf, jnp.float32)
        l_sc[...] = jnp.zeros(l_sc.shape, jnp.float32)
        acc_sc[...] = jnp.zeros(acc_sc.shape, jnp.float32)

    q = q_ref[...]                                   # [Bb, C, T]
    k = k_ref[...]                                   # [Bb, C, Tk]
    v = v_ref[...]                                   # [Bb, C, Tk]

    # s[b, s, t] = sum_c k[b, c, s] * q[b, c, t]  (T stays on the lane axis;
    # softmax axis is the sublane axis -> no per-tile transposes needed).
    s = lax.dot_general(
        k, q,
        dimension_numbers=(((1,), (1,)), ((0,), (0,))),
        preferred_element_type=jnp.float32,
    )                                                # [Bb, Tk, T] f32
    s = s * logit_scale                              # folded (ch**-0.25)^2 scale

    m_prev = m_sc[...]                               # [Bb, 1, T]
    m_new = jnp.maximum(m_prev, jnp.max(s, axis=1, keepdims=True))
    alpha = jnp.exp(m_prev - m_new)                  # [Bb, 1, T]
    p = jnp.exp(s - m_new)                           # [Bb, Tk, T] f32
    l_sc[...] = alpha * l_sc[...] + jnp.sum(p, axis=1, keepdims=True)
    m_sc[...] = m_new

    # acc[b, c, t] += sum_s v[b, c, s] * p[b, s, t]
    # (weights cast back to the input dtype, like torch's .type(weight.dtype))
    pv = lax.dot_general(
        v, p.astype(v.dtype),
        dimension_numbers=(((2,), (1,)), ((0,), (0,))),
        preferred_element_type=jnp.float32,
    )                                                # [Bb, C, T] f32
    acc_sc[...] = alpha * acc_sc[...] + pv

    @pl.when(kv == pl.num_programs(1) - 1)
    def _finalize():
        inv_l = pl.reciprocal(l_sc[...], approx=True)   # EUP slot, ~free next to exp
        o_ref[...] = (acc_sc[...] * inv_l).astype(o_ref.dtype)


def _choose_kv_tile(T):
    """Largest kv tile that divides T and satisfies the lane-dim constraint."""
    if T > 512 and T % 128 == 0:
        for tk in (512, 256, 128):
            if T % tk == 0:
                return tk
    return T


def _choose_block_b(B, C, T, Tk, itemsize, budget_bytes):
    """Largest heads-per-step that divides B, keeps >=2 parallel grid steps
    when possible (v7x megacore), and fits the VMEM budget (double-buffered
    q/k/v/o + f32 scratch + f32 score temporaries)."""
    cap = min(max(1, B // 2), 64)
    best = 1
    for bb in range(1, cap + 1):
        if B % bb:
            continue
        io_bytes = 2 * itemsize * (2 * bb * C * T + 2 * bb * C * Tk)
        scr_bytes = 4 * bb * (C * T + 2 * T)
        tmp_bytes = 2 * 4 * bb * Tk * T
        if io_bytes + scr_bytes + tmp_bytes <= budget_bytes:
            best = bb
    return best


def qkv_attention(qkv, n_heads, kv_block=None):
    """Pallas equivalent of QKVAttention.forward.

    qkv: [N, 3*H*C, T]  ->  returns [N, H*C, T]
    """
    bs, width, length = qkv.shape
    assert width % (3 * n_heads) == 0
    ch = width // (3 * n_heads)
    B = bs * n_heads
    T = length
    itemsize = jnp.dtype(qkv.dtype).itemsize

    # Split and fold heads into batch; stay in native [B, C, T] (lane dim = T).
    q, k, v = jnp.split(qkv, 3, axis=1)
    q = q.reshape(B, ch, T)
    k = k.reshape(B, ch, T)
    v = v.reshape(B, ch, T)

    tk = kv_block if kv_block is not None else _choose_kv_tile(T)
    assert T % tk == 0 and (tk == T or tk % 128 == 0), "kv tile must divide T (mult of 128)"
    bblk = _choose_block_b(B, ch, T, tk, itemsize, _VMEM_BLOCK_BUDGET)

    grid = (B // bblk, T // tk)
    kernel = partial(_attn_kernel, logit_scale=1.0 / math.sqrt(ch))

    q_spec = pl.BlockSpec((bblk, ch, T), lambda b, s: (b, 0, 0))
    kv_spec = pl.BlockSpec((bblk, ch, tk), lambda b, s: (b, 0, s))
    o_spec = pl.BlockSpec((bblk, ch, T), lambda b, s: (b, 0, 0))

    out = pl.pallas_call(
        kernel,
        out_shape=jax.ShapeDtypeStruct((B, ch, T), qkv.dtype),
        grid_spec=pltpu.PrefetchScalarGridSpec(
            num_scalar_prefetch=0,
            grid=grid,
            in_specs=[q_spec, kv_spec, kv_spec],
            out_specs=o_spec,
            scratch_shapes=[
                pltpu.VMEM((bblk, 1, T), jnp.float32),   # running max  m
                pltpu.VMEM((bblk, 1, T), jnp.float32),   # running sum  l
                pltpu.VMEM((bblk, ch, T), jnp.float32),  # output accumulator
            ],
        ),
        compiler_params=pltpu.CompilerParams(
            dimension_semantics=("parallel", "arbitrary"),
            vmem_limit_bytes=_VMEM_LIMIT_BYTES,
        ),
        cost_estimate=pl.CostEstimate(
            flops=4 * B * T * T * ch,
            transcendentals=B * T * T,
            bytes_accessed=(qkv.size + B * ch * T) * itemsize,
        ),
    )(q, k, v)

    # [B, C, T] -> [N, H*C, T] is a pure reshape (no transpose).
    return out.reshape(bs, n_heads * ch, T)


def qkv_attention_ref(qkv, n_heads):
    """Pure-JAX reference mirroring the PyTorch module, for verification."""
    bs, width, length = qkv.shape
    ch = width // (3 * n_heads)
    q, k, v = jnp.split(qkv, 3, axis=1)
    scale = 1.0 / math.sqrt(math.sqrt(ch))
    qr = (q * scale).reshape(bs * n_heads, ch, length)
    kr = (k * scale).reshape(bs * n_heads, ch, length)
    vr = v.reshape(bs * n_heads, ch, length)
    weight = jnp.einsum("bct,bcs->bts", qr, kr)
    weight = jax.nn.softmax(weight.astype(jnp.float32), axis=-1).astype(qkv.dtype)
    a = jnp.einsum("bts,bcs->bct", weight, vr)
    return a.reshape(bs, -1, length)


if __name__ == "__main__":
    key = jax.random.PRNGKey(0)
    k1, k2 = jax.random.split(key)

    # Test 1: small shapes consistent with the module (N=2, H=2, C=8, T=16).
    N, H, C, T = 2, 2, 8, 16
    qkv = jax.random.normal(k1, (N, 3 * H * C, T), dtype=jnp.float32)
    out = jax.block_until_ready(qkv_attention(qkv, n_heads=H))
    ref = qkv_attention_ref(qkv, n_heads=H)
    assert out.shape == (N, H * C, T)
    # Tolerance covers pl.reciprocal(approx=True) in the softmax normalization.
    assert jnp.allclose(out, ref, atol=3e-3, rtol=3e-3), float(jnp.max(jnp.abs(out - ref)))

    # Test 2: exercises the multi-step online-softmax (kv-tiled) path.
    N2, H2, C2, T2 = 1, 2, 16, 256
    qkv2 = jax.random.normal(k2, (N2, 3 * H2 * C2, T2), dtype=jnp.float32)
    out2 = jax.block_until_ready(qkv_attention(qkv2, n_heads=H2, kv_block=128))
    ref2 = qkv_attention_ref(qkv2, n_heads=H2)
    assert out2.shape == (N2, H2 * C2, T2)
    assert jnp.allclose(out2, ref2, atol=3e-3, rtol=3e-3), float(jnp.max(jnp.abs(out2 - ref2)))

    print("KERNEL_OK")
</pallas_src>

<mosaic_0001>
module attributes {stable_mosaic.version = 11 : i64} {
  func.func @_attn_kernel(%arg0: i32, %arg1: i32, %arg2: memref<2x8x16xf32, #tpu.memory_space<vmem>>, %arg3: memref<2x8x16xf32, #tpu.memory_space<vmem>>, %arg4: memref<2x8x16xf32, #tpu.memory_space<vmem>>, %arg5: memref<2x8x16xf32, #tpu.memory_space<vmem>>, %arg6: memref<2x1x16xf32, #tpu.memory_space<vmem>>, %arg7: memref<2x1x16xf32, #tpu.memory_space<vmem>>, %arg8: memref<2x8x16xf32, #tpu.memory_space<vmem>>) attributes {dimension_semantics = [#tpu.dimension_semantics<parallel>, #tpu.dimension_semantics<arbitrary>], iteration_bounds = array<i64: 2, 1>, scalar_prefetch = 0 : i64, scratch_operands = 3 : i64, tpu.core_type = #tpu.core_type<tc>, window_params = [{transform_indices = @transform_0, window_bounds = array<i64: 2, 8, 16>}, {transform_indices = @transform_1, window_bounds = array<i64: 2, 8, 16>}, {transform_indices = @transform_2, window_bounds = array<i64: 2, 8, 16>}, {transform_indices = @transform_3, window_bounds = array<i64: 2, 8, 16>}]} {
    %c0_i32 = arith.constant 0 : i32
    %0 = arith.cmpi eq, %arg1, %c0_i32 : i32
    %1 = arith.extui %0 : i1 to i32
    %c0_i32_0 = arith.constant 0 : i32
    %2 = arith.cmpi ne, %1, %c0_i32_0 : i32
    scf.if %2 {
      %cst_33 = arith.constant 0xFF800000 : f32
      %34 = vector.broadcast %cst_33 : f32 to vector<2x1x16xf32>
      %c0_34 = arith.constant 0 : index
      %c0_35 = arith.constant 0 : index
      %c0_36 = arith.constant 0 : index
      %35 = vector.load %arg6[%c0_34, %c0_35, %c0_36] : memref<2x1x16xf32, #tpu.memory_space<vmem>>, vector<2x1x16xf32>
      tpu.vector_store %arg6[%c0_34, %c0_35, %c0_36], %34 {strides = array<i32>} : memref<2x1x16xf32, #tpu.memory_space<vmem>>, vector<2x1x16xf32>,
      %cst_37 = arith.constant 0.000000e+00 : f32
      %36 = vector.broadcast %cst_37 : f32 to vector<2x1x16xf32>
      %c0_38 = arith.constant 0 : index
      %c0_39 = arith.constant 0 : index
      %c0_40 = arith.constant 0 : index
      %37 = vector.load %arg7[%c0_38, %c0_39, %c0_40] : memref<2x1x16xf32, #tpu.memory_space<vmem>>, vector<2x1x16xf32>
      tpu.vector_store %arg7[%c0_38, %c0_39, %c0_40], %36 {strides = array<i32>} : memref<2x1x16xf32, #tpu.memory_space<vmem>>, vector<2x1x16xf32>,
      %cst_41 = arith.constant 0.000000e+00 : f32
      %38 = vector.broadcast %cst_41 : f32 to vector<2x8x16xf32>
      %c0_42 = arith.constant 0 : index
      %c0_43 = arith.constant 0 : index
      %c0_44 = arith.constant 0 : index
      %39 = vector.load %arg8[%c0_42, %c0_43, %c0_44] : memref<2x8x16xf32, #tpu.memory_space<vmem>>, vector<2x8x16xf32>
      tpu.vector_store %arg8[%c0_42, %c0_43, %c0_44], %38 {strides = array<i32>} : memref<2x8x16xf32, #tpu.memory_space<vmem>>, vector<2x8x16xf32>,
    } else {
    }
    %c0 = arith.constant 0 : index
    %c0_1 = arith.constant 0 : index
    %c0_2 = arith.constant 0 : index
    %3 = vector.load %arg2[%c0, %c0_1, %c0_2] : memref<2x8x16xf32, #tpu.memory_space<vmem>>, vector<2x8x16xf32>
    %c0_3 = arith.constant 0 : index
    %c0_4 = arith.constant 0 : index
    %c0_5 = arith.constant 0 : index
    %4 = vector.load %arg3[%c0_3, %c0_4, %c0_5] : memref<2x8x16xf32, #tpu.memory_space<vmem>>, vector<2x8x16xf32>
    %c0_6 = arith.constant 0 : index
    %c0_7 = arith.constant 0 : index
    %c0_8 = arith.constant 0 : index
    %5 = vector.load %arg4[%c0_6, %c0_7, %c0_8] : memref<2x8x16xf32, #tpu.memory_space<vmem>>, vector<2x8x16xf32>
    %cst = arith.constant dense<0.000000e+00> : vector<2x16x16xf32>
    %6 = tpu.matmul %4, %3, %cst {dimension_numbers = #tpu.dot_dimension_numbers<[1], [1], [2], [2], [0, 0, 0, 2, 1, 2], [0], [0]>} : vector<2x8x16xf32>, vector<2x8x16xf32>, vector<2x16x16xf32> -> vector<2x16x16xf32>
    %cst_9 = arith.constant 0.353553385 : f32
    %7 = vector.broadcast %cst_9 : f32 to vector<2x16x16xf32>
    %8 = arith.mulf %6, %7 : vector<2x16x16xf32>
    %c0_10 = arith.constant 0 : index
    %c0_11 = arith.constant 0 : index
    %c0_12 = arith.constant 0 : index
    %9 = vector.load %arg6[%c0_10, %c0_11, %c0_12] : memref<2x1x16xf32, #tpu.memory_space<vmem>>, vector<2x1x16xf32>
    %cst_13 = arith.constant dense<0xFF800000> : vector<2x16xf32>
    %10 = vector.multi_reduction <maximumf>, %8, %cst_13 [1] : vector<2x16x16xf32> to vector<2x16xf32>
    %11 = vector.shape_cast %10 : vector<2x16xf32> to vector<2x1x16xf32>
    %12 = arith.maximumf %9, %11 : vector<2x1x16xf32>
    %13 = arith.subf %9, %12 : vector<2x1x16xf32>
    %14 = math.exp %13 : vector<2x1x16xf32>
    %15 = vector.broadcast %12 : vector<2x1x16xf32> to vector<2x16x16xf32>
    %16 = arith.subf %8, %15 : vector<2x16x16xf32>
    %17 = math.exp %16 : vector<2x16x16xf32>
    %c0_14 = arith.constant 0 : index
    %c0_15 = arith.constant 0 : index
    %c0_16 = arith.constant 0 : index
    %18 = vector.load %arg7[%c0_14, %c0_15, %c0_16] : memref<2x1x16xf32, #tpu.memory_space<vmem>>, vector<2x1x16xf32>
    %19 = arith.mulf %14, %18 : vector<2x1x16xf32>
    %cst_17 = arith.constant dense<0.000000e+00> : vector<2x16xf32>
    %20 = vector.multi_reduction <add>, %17, %cst_17 [1] : vector<2x16x16xf32> to vector<2x16xf32>
    %21 = vector.shape_cast %20 : vector<2x16xf32> to vector<2x1x16xf32>
    %22 = arith.addf %19, %21 : vector<2x1x16xf32>
    %c0_18 = arith.constant 0 : index
    %c0_19 = arith.constant 0 : index
    %c0_20 = arith.constant 0 : index
    %23 = vector.load %arg7[%c0_18, %c0_19, %c0_20] : memref<2x1x16xf32, #tpu.memory_space<vmem>>, vector<2x1x16xf32>
    tpu.vector_store %arg7[%c0_18, %c0_19, %c0_20], %22 {strides = array<i32>} : memref<2x1x16xf32, #tpu.memory_space<vmem>>, vector<2x1x16xf32>,
    %c0_21 = arith.constant 0 : index
    %c0_22 = arith.constant 0 : index
    %c0_23 = arith.constant 0 : index
    %24 = vector.load %arg6[%c0_21, %c0_22, %c0_23] : memref<2x1x16xf32, #tpu.memory_space<vmem>>, vector<2x1x16xf32>
    tpu.vector_store %arg6[%c0_21, %c0_22, %c0_23], %12 {strides = array<i32>} : memref<2x1x16xf32, #tpu.memory_space<vmem>>, vector<2x1x16xf32>,
    %cst_24 = arith.constant dense<0.000000e+00> : vector<2x8x16xf32>
    %25 = tpu.matmul %5, %17, %cst_24 {dimension_numbers = #tpu.dot_dimension_numbers<[2], [1], [1], [2], [0, 0, 0, 1, 1, 2], [0], [0]>} : vector<2x8x16xf32>, vector<2x16x16xf32>, vector<2x8x16xf32> -> vector<2x8x16xf32>
    %c0_25 = arith.constant 0 : index
    %c0_26 = arith.constant 0 : index
    %c0_27 = arith.constant 0 : index
    %26 = vector.load %arg8[%c0_25, %c0_26, %c0_27] : memref<2x8x16xf32, #tpu.memory_space<vmem>>, vector<2x8x16xf32>
    %27 = vector.broadcast %14 : vector<2x1x16xf32> to vector<2x8x16xf32>
    %28 = arith.mulf %27, %26 : vector<2x8x16xf32>
    %29 = arith.addf %28, %25 : vector<2x8x16xf32>
    %c0_28 = arith.constant 0 : index
    %c0_29 = arith.constant 0 : index
    %c0_30 = arith.constant 0 : index
    %30 = vector.load %arg8[%c0_28, %c0_29, %c0_30] : memref<2x8x16xf32, #tpu.memory_space<vmem>>, vector<2x8x16xf32>
    tpu.vector_store %arg8[%c0_28, %c0_29, %c0_30], %29 {strides = array<i32>} : memref<2x8x16xf32, #tpu.memory_space<vmem>>, vector<2x8x16xf32>,
    %c0_i32_31 = arith.constant 0 : i32
    %31 = arith.cmpi eq, %arg1, %c0_i32_31 : i32
    %32 = arith.extui %31 : i1 to i32
    %c0_i32_32 = arith.constant 0 : i32
    %33 = arith.cmpi ne, %32, %c0_i32_32 : i32
    scf.if %33 {
      %c0_33 = arith.constant 0 : index
      %c0_34 = arith.constant 0 : index
      %c0_35 = arith.constant 0 : index
      %34 = vector.load %arg7[%c0_33, %c0_34, %c0_35] : memref<2x1x16xf32, #tpu.memory_space<vmem>>, vector<2x1x16xf32>
      %35 = tpu.reciprocal %34 {approx = true} : vector<2x1x16xf32> -> vector<2x1x16xf32>
      %c0_36 = arith.constant 0 : index
      %c0_37 = arith.constant 0 : index
      %c0_38 = arith.constant 0 : index
      %36 = vector.load %arg8[%c0_36, %c0_37, %c0_38] : memref<2x8x16xf32, #tpu.memory_space<vmem>>, vector<2x8x16xf32>
      %37 = vector.broadcast %35 : vector<2x1x16xf32> to vector<2x8x16xf32>
      %38 = arith.mulf %36, %37 : vector<2x8x16xf32>
      %c0_39 = arith.constant 0 : index
      %c0_40 = arith.constant 0 : index
      %c0_41 = arith.constant 0 : index
      %39 = vector.load %arg5[%c0_39, %c0_40, %c0_41] : memref<2x8x16xf32, #tpu.memory_space<vmem>>, vector<2x8x16xf32>
      tpu.vector_store %arg5[%c0_39, %c0_40, %c0_41], %38 {strides = array<i32>} : memref<2x8x16xf32, #tpu.memory_space<vmem>>, vector<2x8x16xf32>,
    } else {
    }
    return
  }
  func.func @transform_0(%arg0: i32, %arg1: i32) -> (i32, i32, i32) {
    %c0_i32 = arith.constant 0 : i32
    %c0_i32_0 = arith.constant 0 : i32
    %c0_i32_1 = arith.constant 0 : i32
    return %arg0, %c0_i32, %c0_i32_0 : i32, i32, i32
  }
  func.func @transform_1(%arg0: i32, %arg1: i32) -> (i32, i32, i32) {
    %c0_i32 = arith.constant 0 : i32
    %c0_i32_0 = arith.constant 0 : i32
    return %arg0, %c0_i32, %arg1 : i32, i32, i32
  }
  func.func @transform_2(%arg0: i32, %arg1: i32) -> (i32, i32, i32) {
    %c0_i32 = arith.constant 0 : i32
    %c0_i32_0 = arith.constant 0 : i32
    return %arg0, %c0_i32, %arg1 : i32, i32, i32
  }
  func.func @transform_3(%arg0: i32, %arg1: i32) -> (i32, i32, i32) {
    %c0_i32 = arith.constant 0 : i32
    %c0_i32_0 = arith.constant 0 : i32
    %c0_i32_1 = arith.constant 0 : i32
    return %arg0, %c0_i32, %c0_i32_0 : i32, i32, i32
  }
}

</mosaic_0001>

<llo_original>
// kernel: tpu_custom_call.1
$region0: #{tpu_custom_call.1}
  #allocation0 [shape = 'u32[]', space=smem, size = 0x4, offset = 0x4, fixed_abs, tag = 'smem constant byte address 0x4 - core index']
  #allocation1 [shape = 'u32[144,128]{1,0:T(1,128)}', space=vmem, size = 0x12000, scoped, tag = 'internal scratch']
  #allocation2 [shape = 'f32[2,1,16]{2,1,0:T(1,128)}', space=vmem, size = 0x400, scoped, tag = 'scratch operand']
  #allocation3 [shape = 'f32[2,1,16]{2,1,0:T(1,128)}', space=vmem, size = 0x400, scoped, tag = 'scratch operand']
  #allocation4 [shape = 'f32[2,8,16]{2,1,0:T(8,128)}', space=vmem, size = 0x2000, scoped, tag = 'scratch operand']
  %s0 = inlined_call_operand.hbm [shape: f32[4,8,16], index: 0, kind: input, shape index: {}]
  %s1 = inlined_call_operand.hbm [shape: f32[4,8,16], index: 1, kind: input, shape index: {}]
  %s2 = inlined_call_operand.hbm [shape: f32[4,8,16], index: 2, kind: input, shape index: {}]
  %s3 = inlined_call_operand.hbm [shape: f32[4,8,16], index: 3, kind: output, shape index: {}]
  %s4 = sld [smem:[#allocation0]]
  $region65: #{tpu_custom_call.1} parent=0
    _
  %s6 = ssub.s32 1, %s4
  %s7 = scalar_select 0, %s6, %s4
  $region1: #{tpu_custom_call.1} parent=0
    #allocation5 [shape = 'u8[16384]{0}', space=vmem, size = 0x4000, scoped, tag = 'input window, operand 0']
    #allocation6 [shape = 's32[2]{0}', space=sflag, size = 0x8, scoped, tag = 'scoped memory for tpu_custom_call.1']
    #allocation7 [shape = 's32[2]{0}', space=sflag, size = 0x8, scoped, tag = 'scoped memory for tpu_custom_call.1']
    #allocation8 [shape = 'u8[16384]{0}', space=vmem, size = 0x4000, scoped, tag = 'input window, operand 1']
    #allocation9 [shape = 's32[2]{0}', space=sflag, size = 0x8, scoped, tag = 'scoped memory for tpu_custom_call.1']
    #allocation10 [shape = 'u8[16384]{0}', space=vmem, size = 0x4000, scoped, tag = 'input window, operand 2']
    #allocation11 [shape = 'u8[16384]{0}', space=vmem, size = 0x4000, scoped, tag = 'output window, operand 0']
    %8 = vsyncpa [#allocation6], 0
    %s9 = scalar_lea.sflag [#allocation6], 1
    %10 = vsyncpa %s9, 0
    %11 = vsyncpa [#allocation9], 0
    %s12 = scalar_lea.sflag [#allocation9], 1
    %13 = vsyncpa %s12, 0
    %14 = vsyncpa [#allocation7], 0
    %s15 = scalar_lea.sflag [#allocation7], 1
    %16 = vsyncpa %s15, 0
    loop: start=0, step=1, limit=4
    $region2: #{tpu_custom_call.1} parent=1 // loop_pre_header
      _
    $region3: #{tpu_custom_call.1} parent=1 // loop_header
      %s18 = sphi 0, %s22
      %p19 = scmp.ge.s32.totalorder %s18, 4
      %s25 = sphi 0, %s37
      %s26 = sphi 0, %s33
      %s27 = sphi 0, %s25
      %s28 = sphi 0, %s26
      %s29 = sphi 0, %s27
      %s30 = sphi 0, %s28
      %s40 = sphi 0, %s42
      %s43 = sphi 0, %s40
      %s44 = sphi 0, %s43
      %s60 = sphi 0, %s44
      %s68 = sphi 0, %s70
      %s71 = sphi 0, %s68
      %s72 = sphi 0, %s71
      %s88 = sphi 0, %s72
      %s96 = sphi 0, %s98
      %s99 = sphi 0, %s96
      %s100 = sphi 0, %s99
      %s116 = sphi 0, %s100
      %s122 = sphi 0, %s124
      %s125 = sphi 0, %s122
      %s126 = sphi 0, %s125
      %s142 = sphi 0, %s126
    $region4: #{tpu_custom_call.1} parent=1 // loop_header_branch
      %21 = sbr.rel (%p19) target = $region8
    $region5: #{tpu_custom_call.1} parent=1 // loop_body
      %s23 = ssub.s32 %s18, 1
      %s24 = ssub.s32 %s18, 2
      %s31 = sadd.s32 1, %s26
      %p32 = scmp.ge.s32.totalorder %s31, 1
      %s33 = scalar_select %p32, 0, %s31
      %s34 = sadd.s32 1, %s25
      %s35 = scalar_select %p32, %s34, %s25
      %p36 = scmp.ge.s32.totalorder %s35, 2
      %s37 = scalar_select %p36, 0, %s35
      %s38 = ssub.s32 %s25, %s37
      %p39 = scmp.eq.s32.totalorder %s38, 0
      %s41 = sadd.s32 %s40, 1
      %s42 = scalar_select %p39, %s40, %s41
      %p45 = pneg %p39
      %p46 = scmp.eq.s32.totalorder %s18, 1
      %p47 = por %p45, %p46
      %p48 = scmp.ne.s32.totalorder %s40, %s43
      %p49 = scmp.eq.s32.totalorder %s18, 0
      %p50 = por %p48, %p49
      %p51 = scmp.ne.s32.totalorder %s40, %s43
      %p52 = scmp.eq.s32.totalorder %s23, 1
      %p53 = por %p51, %p52
      %p54 = scmp.ne.s32.totalorder %s43, %s44
      %p55 = scmp.eq.s32.totalorder %s23, 0
      %p56 = por %p54, %p55
      %p57 = scmp.ne.s32.totalorder %s43, %s44
      %p58 = scmp.eq.s32.totalorder %s24, 1
      %p59 = por %p57, %p58
      %p61 = scmp.ne.s32.totalorder %s44, %s60
      %p62 = scmp.eq.s32.totalorder %s24, 0
      %p63 = por %p61, %p62
      %s64 = ssub.s32 %s25, %s37
      %s65 = ssub.s32 %s26, %s33
      %s66 = sor.u32 %s64, %s65
      %p67 = scmp.eq.s32.totalorder %s66, 0
      %s69 = sadd.s32 %s68, 1
      %s70 = scalar_select %p67, %s68, %s69
      %p73 = pneg %p67
      %p74 = scmp.eq.s32.totalorder %s18, 1
      %p75 = por %p73, %p74
      %p76 = scmp.ne.s32.totalorder %s68, %s71
      %p77 = scmp.eq.s32.totalorder %s18, 0
      %p78 = por %p76, %p77
      %p79 = scmp.ne.s32.totalorder %s68, %s71
      %p80 = scmp.eq.s32.totalorder %s23, 1
      %p81 = por %p79, %p80
      %p82 = scmp.ne.s32.totalorder %s71, %s72
      %p83 = scmp.eq.s32.totalorder %s23, 0
      %p84 = por %p82, %p83
      %p85 = scmp.ne.s32.totalorder %s71, %s72
      %p86 = scmp.eq.s32.totalorder %s24, 1
      %p87 = por %p85, %p86
      %p89 = scmp.ne.s32.totalorder %s72, %s88
      %p90 = scmp.eq.s32.totalorder %s24, 0
      %p91 = por %p89, %p90
      %s92 = ssub.s32 %s25, %s37
      %s93 = ssub.s32 %s26, %s33
      %s94 = sor.u32 %s92, %s93
      %p95 = scmp.eq.s32.totalorder %s94, 0
      %s97 = sadd.s32 %s96, 1
      %s98 = scalar_select %p95, %s96, %s97
      %p101 = pneg %p95
      %p102 = scmp.eq.s32.totalorder %s18, 1
      %p103 = por %p101, %p102
      %p104 = scmp.ne.s32.totalorder %s96, %s99
      %p105 = scmp.eq.s32.totalorder %s18, 0
      %p106 = por %p104, %p105
      %p107 = scmp.ne.s32.totalorder %s96, %s99
      %p108 = scmp.eq.s32.totalorder %s23, 1
      %p109 = por %p107, %p108
      %p110 = scmp.ne.s32.totalorder %s99, %s100
      %p111 = scmp.eq.s32.totalorder %s23, 0
      %p112 = por %p110, %p111
      %p113 = scmp.ne.s32.totalorder %s99, %s100
      %p114 = scmp.eq.s32.totalorder %s24, 1
      %p115 = por %p113, %p114
      %p117 = scmp.ne.s32.totalorder %s100, %s116
      %p118 = scmp.eq.s32.totalorder %s24, 0
      %p119 = por %p117, %p118
      %s120 = ssub.s32 %s25, %s37
      %p121 = scmp.eq.s32.totalorder %s120, 0
      %s123 = sadd.s32 %s122, 1
      %s124 = scalar_select %p121, %s122, %s123
      %p127 = pneg %p121
      %p128 = scmp.eq.s32.totalorder %s18, 1
      %p129 = por %p127, %p128
      %p130 = scmp.ne.s32.totalorder %s122, %s125
      %p131 = scmp.eq.s32.totalorder %s18, 0
      %p132 = por %p130, %p131
      %p133 = scmp.ne.s32.totalorder %s122, %s125
      %p134 = scmp.eq.s32.totalorder %s23, 1
      %p135 = por %p133, %p134
      %p136 = scmp.ne.s32.totalorder %s125, %s126
      %p137 = scmp.eq.s32.totalorder %s23, 0
      %p138 = por %p136, %p137
      %p139 = scmp.ne.s32.totalorder %s125, %s126
      %p140 = scmp.eq.s32.totalorder %s24, 1
      %p141 = por %p139, %p140
      %p143 = scmp.ne.s32.totalorder %s126, %s142
      %p144 = scmp.eq.s32.totalorder %s24, 0
      %p145 = por %p143, %p144
      %p146 = scmp.le.s32.totalorder 1, %s18
      %p147 = scmp.lt.s32.totalorder %s18, 3
      %p148 = pnand %p146, %p147
      %p149 = pneg %p148
      // Predicated region
      $region9: #{tpu_custom_call.1} parent=5 // pred_check
        _
      $region10: #{tpu_custom_call.1} parent=5 // pred_check_branch
        %151 = sbr.rel (%p148) target = $region12
      $region11: #{tpu_custom_call.1} parent=5 // pred_region
        %s152 = ssub.s32 %s18, 1
      $region12: #{tpu_custom_call.1} parent=5 // pred_fallthru
        _
      %p153 = scmp.lt.s32.totalorder %s18, 2
      // Predicated region
      $region13: #{tpu_custom_call.1} parent=5 // pred_check
        %p154 = pneg %p153
      $region14: #{tpu_custom_call.1} parent=5 // pred_check_branch
        %156 = sbr.rel (%p154) target = $region16
      $region15: #{tpu_custom_call.1} parent=5 // pred_region
        // Predicated region
        $region17: #{tpu_custom_call.1} parent=15 // pred_check
          %p157 = pneg %p50
        $region18: #{tpu_custom_call.1} parent=15 // pred_check_branch
          %159 = sbr.rel (%p157) target = $region20
        $region19: #{tpu_custom_call.1} parent=15 // pred_region
          %s160 = sand.u32 %s40, 1
          %s161 = scalar_lea.sflag [#allocation6], %s160
          %s162 = sand.u32 %s40, 1
          %s163 = smul.addr %s162, 16
          %s164 = scalar_lea.vmem [#allocation5], %s163
          %s165 = smul.u32 2, %s25
          %s167 = ssub.s32 256, 256
          %168 = vsyncadd %s161, %s167
          %s169 = smul.addr %s165, 128
          %s170 = scalar_lea.hbm %s0, %s169
          %s171 = sshll.u32 %s164, 4
          %s172 = int_to_ptr.vmem [resolvable:$true] %s171
          %177 = dma.hbm_to_vmem [thread:$0]  %s170, 256, %s172, %s161, 128, 128, 8
        $region20: #{tpu_custom_call.1} parent=15 // pred_fallthru
          _
        // Predicated region
        $region21: #{tpu_custom_call.1} parent=15 // pred_check
          %p178 = pneg %p78
        $region22: #{tpu_custom_call.1} parent=15 // pred_check_branch
          %180 = sbr.rel (%p178) target = $region24
        $region23: #{tpu_custom_call.1} parent=15 // pred_region
          %s181 = sand.u32 %s18, 1
          %s182 = scalar_lea.sflag [#allocation9], %s181
          %s183 = sand.u32 %s68, 1
          %s184 = smul.addr %s183, 16
          %s185 = scalar_lea.vmem [#allocation8], %s184
          %s186 = smul.u32 2, %s25
          %s188 = ssub.s32 256, 256
          %189 = vsyncadd %s182, %s188
          %s190 = sadd.s32 %s26, %s186
          %s191 = smul.addr %s190, 128
          %s192 = scalar_lea.hbm %s1, %s191
          %s193 = sshll.u32 %s185, 4
          %s194 = int_to_ptr.vmem [resolvable:$true] %s193
          %199 = dma.hbm_to_vmem [thread:$0]  %s192, 256, %s194, %s182, 128, 128, 8
        $region24: #{tpu_custom_call.1} parent=15 // pred_fallthru
          _
        // Predicated region
        $region25: #{tpu_custom_call.1} parent=15 // pred_check
          %p200 = pneg %p106
        $region26: #{tpu_custom_call.1} parent=15 // pred_check_branch
          %202 = sbr.rel (%p200) target = $region28
        $region27: #{tpu_custom_call.1} parent=15 // pred_region
          %s203 = sand.u32 %s18, 1
          %s204 = scalar_lea.sflag [#allocation9], %s203
          %s205 = sand.u32 %s96, 1
          %s206 = smul.addr %s205, 16
          %s207 = scalar_lea.vmem [#allocation10], %s206
          %s208 = smul.u32 2, %s25
          %s210 = ssub.s32 256, 256
          %211 = vsyncadd %s204, %s210
          %s212 = sadd.s32 %s26, %s208
          %s213 = smul.addr %s212, 128
          %s214 = scalar_lea.hbm %s2, %s213
          %s215 = sshll.u32 %s207, 4
          %s216 = int_to_ptr.vmem [resolvable:$true] %s215
          %221 = dma.hbm_to_vmem [thread:$0]  %s214, 256, %s216, %s204, 128, 128, 8
        $region28: #{tpu_custom_call.1} parent=15 // pred_fallthru
          _
      $region16: #{tpu_custom_call.1} parent=5 // pred_fallthru
        _
      %p222 = scmp.le.s32.totalorder 1, %s18
      %p223 = scmp.lt.s32.totalorder %s18, 3
      %p224 = pnand %p222, %p223
      %p225 = pneg %p224
      // Predicated region
      $region29: #{tpu_custom_call.1} parent=5 // pred_check
        _
      $region30: #{tpu_custom_call.1} parent=5 // pred_check_branch
        %227 = sbr.rel (%p224) target = $region32
      $region31: #{tpu_custom_call.1} parent=5 // pred_region
        %s228 = ssub.s32 %s18, 1
        %s229 = sand.u32 %s43, 1
        %s230 = scalar_lea.sflag [#allocation6], %s229
        %s231 = sand.u32 %s43, 1
        %s232 = smul.addr %s231, 16
        %s233 = scalar_lea.vmem [#allocation5], %s232
        // Predicated region
        $region33: #{tpu_custom_call.1} parent=31 // pred_check
          %p234 = pneg %p56
        $region34: #{tpu_custom_call.1} parent=31 // pred_check_branch
          %236 = sbr.rel (%p234) target = $region36
        $region35: #{tpu_custom_call.1} parent=31 // pred_region
          %237 = dma.done %s230, 256
        $region36: #{tpu_custom_call.1} parent=31 // pred_fallthru
          _
        %s238 = sand.u32 %s23, 1
        %s239 = scalar_lea.sflag [#allocation9], %s238
        %s240 = sand.u32 %s71, 1
        %s241 = smul.addr %s240, 16
        %s242 = scalar_lea.vmem [#allocation8], %s241
        // Predicated region
        $region37: #{tpu_custom_call.1} parent=31 // pred_check
          %p243 = pneg %p84
        $region38: #{tpu_custom_call.1} parent=31 // pred_check_branch
          %245 = sbr.rel (%p243) target = $region40
        $region39: #{tpu_custom_call.1} parent=31 // pred_region
          %246 = dma.done %s239, 256
        $region40: #{tpu_custom_call.1} parent=31 // pred_fallthru
          _
        %s247 = sand.u32 %s23, 1
        %s248 = scalar_lea.sflag [#allocation9], %s247
        %s249 = sand.u32 %s99, 1
        %s250 = smul.addr %s249, 16
        %s251 = scalar_lea.vmem [#allocation10], %s250
        // Predicated region
        $region41: #{tpu_custom_call.1} parent=31 // pred_check
          %p252 = pneg %p112
        $region42: #{tpu_custom_call.1} parent=31 // pred_check_branch
          %254 = sbr.rel (%p252) target = $region44
        $region43: #{tpu_custom_call.1} parent=31 // pred_region
          %255 = dma.done %s248, 256
        $region44: #{tpu_custom_call.1} parent=31 // pred_fallthru
          _
        %s256 = sand.u32 %s43, 1
        %s257 = scalar_lea.sflag [#allocation6], %s256
        %s258 = sand.u32 %s43, 1
        %s259 = smul.addr %s258, 16
        %s260 = scalar_lea.vmem [#allocation5], %s259
        %p261 = pneg %p56
        %p262 = pneg %p53
        %s263 = sand.u32 %s23, 1
        %s264 = scalar_lea.sflag [#allocation9], %s263
        %s265 = sand.u32 %s71, 1
        %s266 = smul.addr %s265, 16
        %s267 = scalar_lea.vmem [#allocation8], %s266
        %p268 = pneg %p84
        %p269 = pneg %p81
        %s270 = sand.u32 %s23, 1
        %s271 = scalar_lea.sflag [#allocation9], %s270
        %s272 = sand.u32 %s99, 1
        %s273 = smul.addr %s272, 16
        %s274 = scalar_lea.vmem [#allocation10], %s273
        %p275 = pneg %p112
        %p276 = pneg %p109
        %p277 = pneg %p138
        %p278 = pneg %p135
        %s279 = sand.u32 %s125, 1
        %s280 = scalar_lea.sflag [#allocation7], %s279
        %s281 = sand.u32 %s125, 1
        %s282 = smul.addr %s281, 16
        %s283 = scalar_lea.vmem [#allocation11], %s282
        %s284 = smul.u32 2, %s27
        %s285 = smul.u32 2, %s27
        %s286 = smul.u32 2, %s27
        %s287 = smul.u32 2, %s27
        %p288 = scmp.eq.s32.totalorder %s28, 0
        // Predicated region
        $region45: #{tpu_custom_call.1} parent=31 // pred_check
          %p289 = pneg %p288
        $region46: #{tpu_custom_call.1} parent=31 // pred_check_branch
          %291 = sbr.rel (%p289) target = $region48
        $region47: #{tpu_custom_call.1} parent=31 // pred_region
          %vm292 = vcmask 122880
          %293 = vst.msk [vmem:[#allocation2] sm:$0x1] %vm292, -inf
          %294 = vst.msk [vmem:[#allocation2 + $0x1] sm:$0x1] %vm292, -inf
          %295 = vst.msk [vmem:[#allocation3] sm:$0x1] %vm292, 0.0
          %296 = vst.msk [vmem:[#allocation3 + $0x1] sm:$0x1] %vm292, 0.0
          %vm297 = vcmask 130048
          %298 = vst.msk [vmem:[#allocation4] sm:$0xff] %vm297, 0.0
          %299 = vst.msk [vmem:[#allocation4 + $0x8] sm:$0xff] %vm297, 0.0
        $region48: #{tpu_custom_call.1} parent=31 // pred_fallthru
          _
        %v300 = vld [vmem:[%s233] sm:$0xff]
        %v301 = vld [vmem:[%s233 + $0x8] sm:$0xff]
        %v302 = vld [vmem:[%s242] sm:$0xff]
        %v303 = vld [vmem:[%s242 + $0x8] sm:$0xff]
        %v304 = vld [vmem:[%s251] sm:$0xff]
        %v305 = vld [vmem:[%s251 + $0x8] sm:$0xff]
        %306 = vxpose.xlu0.b32.start [1/16] %v302, 128
        %307 = vxpose.xlu0.b32.cont [2/16] 0.0, 128
        %308 = vxpose.xlu0.b32.cont [3/16] 0.0, 128
        %309 = vxpose.xlu0.b32.cont [4/16] 0.0, 128
        %310 = vxpose.xlu0.b32.cont [5/16] 0.0, 128
        %311 = vxpose.xlu0.b32.cont [6/16] 0.0, 128
        %312 = vxpose.xlu0.b32.cont [7/16] 0.0, 128
        %313 = vxpose.xlu0.b32.cont [8/16] 0.0, 128
        %314 = vxpose.xlu0.b32.cont [9/16] 0.0, 128
        %315 = vxpose.xlu0.b32.cont [10/16] 0.0, 128
        %316 = vxpose.xlu0.b32.cont [11/16] 0.0, 128
        %317 = vxpose.xlu0.b32.cont [12/16] 0.0, 128
        %318 = vxpose.xlu0.b32.cont [13/16] 0.0, 128
        %319 = vxpose.xlu0.b32.cont [14/16] 0.0, 128
        %320 = vxpose.xlu0.b32.cont [15/16] 0.0, 128
        %321 = vxpose.xlu0.b32.end [16/16] 0.0, 128
        %v322 = vpop.trf.xlu0
        %v323 = vpop.trf.xlu0
        %v324 = vpop.trf.xlu0
        %v325 = vpop.trf.xlu0
        %v326 = vpop.trf.xlu0
        %v327 = vpop.trf.xlu0
        %v328 = vpop.trf.xlu0
        %v329 = vpop.trf.xlu0
        %v330 = vpop.trf.xlu0
        %v331 = vpop.trf.xlu0
        %v332 = vpop.trf.xlu0
        %v333 = vpop.trf.xlu0
        %v334 = vpop.trf.xlu0
        %v335 = vpop.trf.xlu0
        %v336 = vpop.trf.xlu0
        %v337 = vpop.trf.xlu0
        %vm338 = vcmask 64512
        %v340 = vsel %vm338, %v322, 0
        %v343 = vsel %vm338, %v323, 0
        %345 = vmatprep.subr.mxu0 0.0
        %346 = vmatpush1.msra.mxu0 %v300
        %347 = vmatprep.subr.mxu0 0.0
        %348 = vmatpush1.msra.mxu0 0.0
        %349 = vmatprep.subr.mxu0 0.0
        %350 = vmatpush1.msra.mxu0 0.0
        %351 = vmatprep.subr.mxu0 0.0
        %352 = vmatpush1.msra.mxu0 0.0
        %353 = vmatprep.subr.mxu0 0.0
        %354 = vmatpush1.msra.mxu0 0.0
        %355 = vmatprep.subr.mxu0 0.0
        %356 = vmatpush1.msra.mxu0 0.0
        %357 = vmatprep.subr.mxu0 0.0
        %358 = vmatpush1.msra.mxu0 0.0
        %359 = vmatprep.subr.mxu0 0.0
        %360 = vmatpush1.msra.mxu0 0.0
        %361 = vmatprep.subr.mxu0 0.0
        %362 = vmatpush1.msra.mxu0 0.0
        %363 = vmatprep.subr.mxu0 0.0
        %364 = vmatpush1.msra.mxu0 0.0
        %365 = vmatprep.subr.mxu0 0.0
        %366 = vmatpush1.msra.mxu0 0.0
        %367 = vmatprep.subr.mxu0 0.0
        %368 = vmatpush1.msra.mxu0 0.0
        %369 = vmatprep.subr.mxu0 0.0
        %370 = vmatpush1.msra.mxu0 0.0
        %371 = vmatprep.subr.mxu0 0.0
        %372 = vmatpush1.msra.mxu0 0.0
        %373 = vmatprep.subr.mxu0 0.0
        %374 = vmatpush1.msra.mxu0 0.0
        %375 = vmatprep.subr.mxu0 0.0
        %376 = vmatpush1.msra.mxu0 0.0
        %377 = vmatprep.subr.mxu0 0.0
        %378 = vmatpush1.msra.mxu0 0.0
        %379 = vmatprep.subr.mxu0 0.0
        %380 = vmatpush1.msra.mxu0 0.0
        %381 = vmatprep.subr.mxu0 0.0
        %382 = vmatpush1.msra.mxu0 0.0
        %383 = vmatprep.subr.mxu0 0.0
        %384 = vmatpush1.msra.mxu0 0.0
        %385 = vmatprep.subr.mxu0 0.0
        %386 = vmatpush1.msra.mxu0 0.0
        %387 = vmatprep.subr.mxu0 0.0
        %388 = vmatpush1.msra.mxu0 0.0
        %389 = vmatprep.subr.mxu0 0.0
        %390 = vmatpush1.msra.mxu0 0.0
        %391 = vmatprep.subr.mxu0 0.0
        %392 = vmatpush1.msra.mxu0 0.0
        %393 = vmatprep.subr.mxu0 0.0
        %394 = vmatpush1.msra.mxu0 0.0
        %395 = vmatprep.subr.mxu0 0.0
        %396 = vmatpush1.msra.mxu0 0.0
        %397 = vmatprep.subr.mxu0 0.0
        %398 = vmatpush1.msra.mxu0 0.0
        %399 = vmatprep.subr.mxu0 0.0
        %400 = vmatpush1.msra.mxu0 0.0
        %401 = vmatprep.subr.mxu0 0.0
        %402 = vmatpush1.msra.mxu0 0.0
        %403 = vmatprep.subr.mxu0 0.0
        %404 = vmatpush1.msra.mxu0 0.0
        %405 = vmatprep.subr.mxu0 0.0
        %406 = vmatpush1.msra.mxu0 0.0
        %407 = vmatprep.subr.mxu0 0.0
        %408 = vmatpush1.msra.mxu0 0.0
        %409 = vmatprep.mubr.f32.mxu0 0.0
        %410 = vmatmul.mubr.f32.gmra.mrb[0].mxu0 %v340
        %v411 = vpop.f32.mrb[0].mxu0
        %v412 = vadd.f32 0.0, %v411
        %v413 = vpop.f32.mrb[0].mxu0
        %414 = vmatprep.mubr.f32.mxu0 0.0
        %415 = vmatmul.mubr.f32.gmra.mrb[0].mxu0 %v343
        %v416 = vpop.f32.mrb[0].mxu0
        %v417 = vadd.f32 0.0, %v416
        %v418 = vpop.f32.mrb[0].mxu0
        %419 = vdwg.mxu0
        %420 = vxpose.xlu0.b32.start [1/16] %v303, 128
        %421 = vxpose.xlu0.b32.cont [2/16] 0.0, 128
        %422 = vxpose.xlu0.b32.cont [3/16] 0.0, 128
        %423 = vxpose.xlu0.b32.cont [4/16] 0.0, 128
        %424 = vxpose.xlu0.b32.cont [5/16] 0.0, 128
        %425 = vxpose.xlu0.b32.cont [6/16] 0.0, 128
        %426 = vxpose.xlu0.b32.cont [7/16] 0.0, 128
        %427 = vxpose.xlu0.b32.cont [8/16] 0.0, 128
        %428 = vxpose.xlu0.b32.cont [9/16] 0.0, 128
        %429 = vxpose.xlu0.b32.cont [10/16] 0.0, 128
        %430 = vxpose.xlu0.b32.cont [11/16] 0.0, 128
        %431 = vxpose.xlu0.b32.cont [12/16] 0.0, 128
        %432 = vxpose.xlu0.b32.cont [13/16] 0.0, 128
        %433 = vxpose.xlu0.b32.cont [14/16] 0.0, 128
        %434 = vxpose.xlu0.b32.cont [15/16] 0.0, 128
        %435 = vxpose.xlu0.b32.end [16/16] 0.0, 128
        %v436 = vpop.trf.xlu0
        %v437 = vpop.trf.xlu0
        %v438 = vpop.trf.xlu0
        %v439 = vpop.trf.xlu0
        %v440 = vpop.trf.xlu0
        %v441 = vpop.trf.xlu0
        %v442 = vpop.trf.xlu0
        %v443 = vpop.trf.xlu0
        %v444 = vpop.trf.xlu0
        %v445 = vpop.trf.xlu0
        %v446 = vpop.trf.xlu0
        %v447 = vpop.trf.xlu0
        %v448 = vpop.trf.xlu0
        %v449 = vpop.trf.xlu0
        %v450 = vpop.trf.xlu0
        %v451 = vpop.trf.xlu0
        %v453 = vsel %vm338, %v436, 0
        %v456 = vsel %vm338, %v437, 0
        %458 = vmatprep.subr.mxu0 0.0
        %459 = vmatpush1.msra.mxu0 %v301
        %460 = vmatprep.subr.mxu0 0.0
        %461 = vmatpush1.msra.mxu0 0.0
        %462 = vmatprep.subr.mxu0 0.0
        %463 = vmatpush1.msra.mxu0 0.0
        %464 = vmatprep.subr.mxu0 0.0
        %465 = vmatpush1.msra.mxu0 0.0
        %466 = vmatprep.subr.mxu0 0.0
        %467 = vmatpush1.msra.mxu0 0.0
        %468 = vmatprep.subr.mxu0 0.0
        %469 = vmatpush1.msra.mxu0 0.0
        %470 = vmatprep.subr.mxu0 0.0
        %471 = vmatpush1.msra.mxu0 0.0
        %472 = vmatprep.subr.mxu0 0.0
        %473 = vmatpush1.msra.mxu0 0.0
        %474 = vmatprep.subr.mxu0 0.0
        %475 = vmatpush1.msra.mxu0 0.0
        %476 = vmatprep.subr.mxu0 0.0
        %477 = vmatpush1.msra.mxu0 0.0
        %478 = vmatprep.subr.mxu0 0.0
        %479 = vmatpush1.msra.mxu0 0.0
        %480 = vmatprep.subr.mxu0 0.0
        %481 = vmatpush1.msra.mxu0 0.0
        %482 = vmatprep.subr.mxu0 0.0
        %483 = vmatpush1.msra.mxu0 0.0
        %484 = vmatprep.subr.mxu0 0.0
        %485 = vmatpush1.msra.mxu0 0.0
        %486 = vmatprep.subr.mxu0 0.0
        %487 = vmatpush1.msra.mxu0 0.0
        %488 = vmatprep.subr.mxu0 0.0
        %489 = vmatpush1.msra.mxu0 0.0
        %490 = vmatprep.subr.mxu0 0.0
        %491 = vmatpush1.msra.mxu0 0.0
        %492 = vmatprep.subr.mxu0 0.0
        %493 = vmatpush1.msra.mxu0 0.0
        %494 = vmatprep.subr.mxu0 0.0
        %495 = vmatpush1.msra.mxu0 0.0
        %496 = vmatprep.subr.mxu0 0.0
        %497 = vmatpush1.msra.mxu0 0.0
        %498 = vmatprep.subr.mxu0 0.0
        %499 = vmatpush1.msra.mxu0 0.0
        %500 = vmatprep.subr.mxu0 0.0
        %501 = vmatpush1.msra.mxu0 0.0
        %502 = vmatprep.subr.mxu0 0.0
        %503 = vmatpush1.msra.mxu0 0.0
        %504 = vmatprep.subr.mxu0 0.0
        %505 = vmatpush1.msra.mxu0 0.0
        %506 = vmatprep.subr.mxu0 0.0
        %507 = vmatpush1.msra.mxu0 0.0
        %508 = vmatprep.subr.mxu0 0.0
        %509 = vmatpush1.msra.mxu0 0.0
        %510 = vmatprep.subr.mxu0 0.0
        %511 = vmatpush1.msra.mxu0 0.0
        %512 = vmatprep.subr.mxu0 0.0
        %513 = vmatpush1.msra.mxu0 0.0
        %514 = vmatprep.subr.mxu0 0.0
        %515 = vmatpush1.msra.mxu0 0.0
        %516 = vmatprep.subr.mxu0 0.0
        %517 = vmatpush1.msra.mxu0 0.0
        %518 = vmatprep.subr.mxu0 0.0
        %519 = vmatpush1.msra.mxu0 0.0
        %520 = vmatprep.subr.mxu0 0.0
        %521 = vmatpush1.msra.mxu0 0.0
        %522 = vmatprep.mubr.f32.mxu0 0.0
        %523 = vmatmul.mubr.f32.gmra.mrb[0].mxu0 %v453
        %v524 = vpop.f32.mrb[0].mxu0
        %v525 = vadd.f32 0.0, %v524
        %v526 = vpop.f32.mrb[0].mxu0
        %527 = vmatprep.mubr.f32.mxu0 0.0
        %528 = vmatmul.mubr.f32.gmra.mrb[0].mxu0 %v456
        %v529 = vpop.f32.mrb[0].mxu0
        %v530 = vadd.f32 0.0, %v529
        %v531 = vpop.f32.mrb[0].mxu0
        %532 = vdwg.mxu0
        %v533 = vmul.f32 %v412, 0.35355338
        %v534 = vmul.f32 %v417, 0.35355338
        %v535 = vmul.f32 %v525, 0.35355338
        %v536 = vmul.f32 %v530, 0.35355338
        %v537 = vld [vmem:[#allocation2] sm:$0x1]
        %v538 = vld [vmem:[#allocation2 + $0x1] sm:$0x1]
        %vm539 = vcmask 130048
        %v540 = vsel %vm539, %v533, -inf
        %v541 = vsel %vm539, %v534, -inf
        %v542 = vmax.f32 %v540, %v541
        %v543 = vrot.slane %v542, 4
        %v544 = vmax.f32 %v542, %v543
        %v545 = vrot.slane %v544, 2
        %v546 = vmax.f32 %v544, %v545
        %v547 = vrot.slane %v546, 1
        %v548 = vmax.f32 %v546, %v547
        %v549 = vsel %vm539, %v535, -inf
        %v550 = vsel %vm539, %v536, -inf
        %v551 = vmax.f32 %v549, %v550
        %v552 = vrot.slane %v551, 4
        %v553 = vmax.f32 %v551, %v552
        %v554 = vrot.slane %v553, 2
        %v555 = vmax.f32 %v553, %v554
        %v556 = vrot.slane %v555, 1
        %v557 = vmax.f32 %v555, %v556
        %v558 = vmax.f32 %v537, %v548
        %v559 = vmax.f32 %v538, %v557
        %v560 = vsub.f32 %v537, %v558
        %v561 = vsub.f32 %v538, %v559
        %v562 = vmul.f32 %v560, 1.442695
        %v563 = vpow.pop %v562
        %v564 = vmul.f32 %v561, 1.442695
        %v565 = vpow.pop %v564
        %v568 = vlaneseq
        %v569 = vshrl.u32 %v568, 7
        %v570 = vsub.s32 0, %v569
        %v571 = vrot.slane %v558, %v570
        %v572 = vlaneseq
        %v573 = vshrl.u32 %v572, 7
        %v574 = vsub.s32 0, %v573
        %v575 = vrot.slane %v559, %v574
        %v578 = vsub.f32 %v533, %v571
        %v579 = vsub.f32 %v534, %v571
        %v580 = vsub.f32 %v535, %v575
        %v581 = vsub.f32 %v536, %v575
        %v582 = vmul.f32 %v578, 1.442695
        %v583 = vpow.pop %v582
        %v584 = vmul.f32 %v579, 1.442695
        %v585 = vpow.pop %v584
        %v586 = vmul.f32 %v580, 1.442695
        %v587 = vpow.pop %v586
        %v588 = vmul.f32 %v581, 1.442695
        %v589 = vpow.pop %v588
        %v590 = vld [vmem:[#allocation3] sm:$0x1]
        %v591 = vld [vmem:[#allocation3 + $0x1] sm:$0x1]
        %v592 = vmul.f32 %v563, %v590
        %v593 = vmul.f32 %v565, %v591
        %v594 = vsel %vm539, %v583, 0.0
        %v595 = vsel %vm539, %v585, 0.0
        %v596 = vadd.f32 %v594, %v595
        %v597 = vrot.slane %v596, 4
        %v598 = vadd.f32 %v596, %v597
        %v599 = vrot.slane %v598, 2
        %v600 = vadd.f32 %v598, %v599
        %v601 = vrot.slane %v600, 1
        %v602 = vadd.f32 %v600, %v601
        %v603 = vsel %vm539, %v587, 0.0
        %v604 = vsel %vm539, %v589, 0.0
        %v605 = vadd.f32 %v603, %v604
        %v606 = vrot.slane %v605, 4
        %v607 = vadd.f32 %v605, %v606
        %v608 = vrot.slane %v607, 2
        %v609 = vadd.f32 %v607, %v608
        %v610 = vrot.slane %v609, 1
        %v611 = vadd.f32 %v609, %v610
        %v612 = vadd.f32 %v592, %v602
        %v613 = vadd.f32 %v593, %v611
        %vm614 = vcmask 122880
        %615 = vst.msk [vmem:[#allocation3] sm:$0x1] %vm614, %v612
        %616 = vst.msk [vmem:[#allocation3 + $0x1] sm:$0x1] %vm614, %v613
        %617 = vst.msk [vmem:[#allocation2] sm:$0x1] %vm614, %v558
        %618 = vst.msk [vmem:[#allocation2 + $0x1] sm:$0x1] %vm614, %v559
        %v620 = vsel %vm539, %v304, 0
        %622 = vmatprep.subr.mxu0 0.0
        %623 = vmatpush1.msra.mxu0 %v583
        %624 = vmatprep.subr.mxu0 0.0
        %625 = vmatpush1.msra.mxu0 %v585
        %626 = vmatprep.subr.mxu0 0.0
        %627 = vmatpush1.msra.mxu0 0.0
        %628 = vmatprep.subr.mxu0 0.0
        %629 = vmatpush1.msra.mxu0 0.0
        %630 = vmatprep.subr.mxu0 0.0
        %631 = vmatpush1.msra.mxu0 0.0
        %632 = vmatprep.subr.mxu0 0.0
        %633 = vmatpush1.msra.mxu0 0.0
        %634 = vmatprep.subr.mxu0 0.0
        %635 = vmatpush1.msra.mxu0 0.0
        %636 = vmatprep.subr.mxu0 0.0
        %637 = vmatpush1.msra.mxu0 0.0
        %638 = vmatprep.subr.mxu0 0.0
        %639 = vmatpush1.msra.mxu0 0.0
        %640 = vmatprep.subr.mxu0 0.0
        %641 = vmatpush1.msra.mxu0 0.0
        %642 = vmatprep.subr.mxu0 0.0
        %643 = vmatpush1.msra.mxu0 0.0
        %644 = vmatprep.subr.mxu0 0.0
        %645 = vmatpush1.msra.mxu0 0.0
        %646 = vmatprep.subr.mxu0 0.0
        %647 = vmatpush1.msra.mxu0 0.0
        %648 = vmatprep.subr.mxu0 0.0
        %649 = vmatpush1.msra.mxu0 0.0
        %650 = vmatprep.subr.mxu0 0.0
        %651 = vmatpush1.msra.mxu0 0.0
        %652 = vmatprep.subr.mxu0 0.0
        %653 = vmatpush1.msra.mxu0 0.0
        %654 = vmatprep.subr.mxu0 0.0
        %655 = vmatpush1.msra.mxu0 0.0
        %656 = vmatprep.subr.mxu0 0.0
        %657 = vmatpush1.msra.mxu0 0.0
        %658 = vmatprep.subr.mxu0 0.0
        %659 = vmatpush1.msra.mxu0 0.0
        %660 = vmatprep.subr.mxu0 0.0
        %661 = vmatpush1.msra.mxu0 0.0
        %662 = vmatprep.subr.mxu0 0.0
        %663 = vmatpush1.msra.mxu0 0.0
        %664 = vmatprep.subr.mxu0 0.0
        %665 = vmatpush1.msra.mxu0 0.0
        %666 = vmatprep.subr.mxu0 0.0
        %667 = vmatpush1.msra.mxu0 0.0
        %668 = vmatprep.subr.mxu0 0.0
        %669 = vmatpush1.msra.mxu0 0.0
        %670 = vmatprep.subr.mxu0 0.0
        %671 = vmatpush1.msra.mxu0 0.0
        %672 = vmatprep.subr.mxu0 0.0
        %673 = vmatpush1.msra.mxu0 0.0
        %674 = vmatprep.subr.mxu0 0.0
        %675 = vmatpush1.msra.mxu0 0.0
        %676 = vmatprep.subr.mxu0 0.0
        %677 = vmatpush1.msra.mxu0 0.0
        %678 = vmatprep.subr.mxu0 0.0
        %679 = vmatpush1.msra.mxu0 0.0
        %680 = vmatprep.subr.mxu0 0.0
        %681 = vmatpush1.msra.mxu0 0.0
        %682 = vmatprep.subr.mxu0 0.0
        %683 = vmatpush1.msra.mxu0 0.0
        %684 = vmatprep.subr.mxu0 0.0
        %685 = vmatpush1.msra.mxu0 0.0
        %686 = vmatprep.mubr.f32.mxu0 0.0
        %687 = vmatmul.mubr.f32.gmra.mrb[0].mxu0 %v620
        %v688 = vpop.f32.mrb[0].mxu0
        %v689 = vadd.f32 0.0, %v688
        %v690 = vpop.f32.mrb[0].mxu0
        %691 = vdwg.mxu0
        %v693 = vsel %vm539, %v305, 0
        %695 = vmatprep.subr.mxu0 0.0
        %696 = vmatpush1.msra.mxu0 %v587
        %697 = vmatprep.subr.mxu0 0.0
        %698 = vmatpush1.msra.mxu0 %v589
        %699 = vmatprep.subr.mxu0 0.0
        %700 = vmatpush1.msra.mxu0 0.0
        %701 = vmatprep.subr.mxu0 0.0
        %702 = vmatpush1.msra.mxu0 0.0
        %703 = vmatprep.subr.mxu0 0.0
        %704 = vmatpush1.msra.mxu0 0.0
        %705 = vmatprep.subr.mxu0 0.0
        %706 = vmatpush1.msra.mxu0 0.0
        %707 = vmatprep.subr.mxu0 0.0
        %708 = vmatpush1.msra.mxu0 0.0
        %709 = vmatprep.subr.mxu0 0.0
        %710 = vmatpush1.msra.mxu0 0.0
        %711 = vmatprep.subr.mxu0 0.0
        %712 = vmatpush1.msra.mxu0 0.0
        %713 = vmatprep.subr.mxu0 0.0
        %714 = vmatpush1.msra.mxu0 0.0
        %715 = vmatprep.subr.mxu0 0.0
        %716 = vmatpush1.msra.mxu0 0.0
        %717 = vmatprep.subr.mxu0 0.0
        %718 = vmatpush1.msra.mxu0 0.0
        %719 = vmatprep.subr.mxu0 0.0
        %720 = vmatpush1.msra.mxu0 0.0
        %721 = vmatprep.subr.mxu0 0.0
        %722 = vmatpush1.msra.mxu0 0.0
        %723 = vmatprep.subr.mxu0 0.0
        %724 = vmatpush1.msra.mxu0 0.0
        %725 = vmatprep.subr.mxu0 0.0
        %726 = vmatpush1.msra.mxu0 0.0
        %727 = vmatprep.subr.mxu0 0.0
        %728 = vmatpush1.msra.mxu0 0.0
        %729 = vmatprep.subr.mxu0 0.0
        %730 = vmatpush1.msra.mxu0 0.0
        %731 = vmatprep.subr.mxu0 0.0
        %732 = vmatpush1.msra.mxu0 0.0
        %733 = vmatprep.subr.mxu0 0.0
        %734 = vmatpush1.msra.mxu0 0.0
        %735 = vmatprep.subr.mxu0 0.0
        %736 = vmatpush1.msra.mxu0 0.0
        %737 = vmatprep.subr.mxu0 0.0
        %738 = vmatpush1.msra.mxu0 0.0
        %739 = vmatprep.subr.mxu0 0.0
        %740 = vmatpush1.msra.mxu0 0.0
        %741 = vmatprep.subr.mxu0 0.0
        %742 = vmatpush1.msra.mxu0 0.0
        %743 = vmatprep.subr.mxu0 0.0
        %744 = vmatpush1.msra.mxu0 0.0
        %745 = vmatprep.subr.mxu0 0.0
        %746 = vmatpush1.msra.mxu0 0.0
        %747 = vmatprep.subr.mxu0 0.0
        %748 = vmatpush1.msra.mxu0 0.0
        %749 = vmatprep.subr.mxu0 0.0
        %750 = vmatpush1.msra.mxu0 0.0
        %751 = vmatprep.subr.mxu0 0.0
        %752 = vmatpush1.msra.mxu0 0.0
        %753 = vmatprep.subr.mxu0 0.0
        %754 = vmatpush1.msra.mxu0 0.0
        %755 = vmatprep.subr.mxu0 0.0
        %756 = vmatpush1.msra.mxu0 0.0
        %757 = vmatprep.subr.mxu0 0.0
        %758 = vmatpush1.msra.mxu0 0.0
        %759 = vmatprep.mubr.f32.mxu0 0.0
        %760 = vmatmul.mubr.f32.gmra.mrb[0].mxu0 %v693
        %v761 = vpop.f32.mrb[0].mxu0
        %v762 = vadd.f32 0.0, %v761
        %v763 = vpop.f32.mrb[0].mxu0
        %764 = vdwg.mxu0
        %v765 = vld [vmem:[#allocation4] sm:$0xff]
        %v766 = vld [vmem:[#allocation4 + $0x8] sm:$0xff]
        %v769 = vlaneseq
        %v770 = vshrl.u32 %v769, 7
        %v771 = vsub.s32 0, %v770
        %v772 = vrot.slane %v563, %v771
        %v773 = vlaneseq
        %v774 = vshrl.u32 %v773, 7
        %v775 = vsub.s32 0, %v774
        %v776 = vrot.slane %v565, %v775
        %v779 = vmul.f32 %v772, %v765
        %v780 = vmul.f32 %v776, %v766
        %v781 = vadd.f32 %v779, %v689
        %v782 = vadd.f32 %v780, %v762
        %783 = vst.msk [vmem:[#allocation4] sm:$0xff] %vm539, %v781
        %784 = vst.msk [vmem:[#allocation4 + $0x8] sm:$0xff] %vm539, %v782
        // Predicated region
        $region49: #{tpu_custom_call.1} parent=31 // pred_check
          %p785 = pneg %p288
        $region50: #{tpu_custom_call.1} parent=31 // pred_check_branch
          %787 = sbr.rel (%p785) target = $region52
        $region51: #{tpu_custom_call.1} parent=31 // pred_region
          %v788 = vld [vmem:[#allocation3] sm:$0x1]
          %v789 = vld [vmem:[#allocation3 + $0x1] sm:$0x1]
          %v790 = vrcp.pop %v788
          %v791 = vrcp.pop %v789
          %v792 = vld [vmem:[#allocation4] sm:$0xff]
          %v793 = vld [vmem:[#allocation4 + $0x8] sm:$0xff]
          %v796 = vlaneseq
          %v797 = vshrl.u32 %v796, 7
          %v798 = vsub.s32 0, %v797
          %v799 = vrot.slane %v790, %v798
          %v800 = vlaneseq
          %v801 = vshrl.u32 %v800, 7
          %v802 = vsub.s32 0, %v801
          %v803 = vrot.slane %v791, %v802
          %v806 = vmul.f32 %v792, %v799
          %v807 = vmul.f32 %v793, %v803
          %808 = vst.msk [vmem:[%s283] sm:$0xff] %vm539, %v806
          %809 = vst.msk [vmem:[%s283 + $0x8] sm:$0xff] %vm539, %v807
        $region52: #{tpu_custom_call.1} parent=31 // pred_fallthru
          _
        %s810 = sand.u32 %s125, 1
        %s811 = scalar_lea.sflag [#allocation7], %s810
        %s812 = sand.u32 %s125, 1
        %s813 = smul.addr %s812, 16
        %s814 = scalar_lea.vmem [#allocation11], %s813
        // Predicated region
        $region53: #{tpu_custom_call.1} parent=31 // pred_check
          %p815 = pneg %p135
        $region54: #{tpu_custom_call.1} parent=31 // pred_check_branch
          %817 = sbr.rel (%p815) target = $region56
        $region55: #{tpu_custom_call.1} parent=31 // pred_region
          %s818 = smul.u32 2, %s27
          %s820 = ssub.s32 256, 256
          %821 = vsyncadd %s811, %s820
          %s822 = smul.addr %s818, 128
          %s823 = scalar_lea.hbm %s3, %s822
          %s824 = sshll.u32 %s814, 4
          %s825 = int_to_ptr.vmem [resolvable:$true] %s824
          %830 = dma.vmem_to_hbm [thread:$0]  %s825, 256, %s823, %s811, 128, 128, 8
        $region56: #{tpu_custom_call.1} parent=31 // pred_fallthru
          _
      $region32: #{tpu_custom_call.1} parent=5 // pred_fallthru
        _
      %p831 = scmp.le.s32.totalorder 2, %s18
      // Predicated region
      $region57: #{tpu_custom_call.1} parent=5 // pred_check
        %p832 = pneg %p831
      $region58: #{tpu_custom_call.1} parent=5 // pred_check_branch
        %834 = sbr.rel (%p832) target = $region60
      $region59: #{tpu_custom_call.1} parent=5 // pred_region
        %s835 = ssub.s32 %s18, 2
        // Predicated region
        $region61: #{tpu_custom_call.1} parent=59 // pred_check
          %p836 = pneg %p141
        $region62: #{tpu_custom_call.1} parent=59 // pred_check_branch
          %838 = sbr.rel (%p836) target = $region64
        $region63: #{tpu_custom_call.1} parent=59 // pred_region
          %s839 = sand.u32 %s126, 1
          %s840 = scalar_lea.sflag [#allocation7], %s839
          %s841 = sand.u32 %s126, 1
          %s842 = smul.addr %s841, 16
          %s843 = scalar_lea.vmem [#allocation11], %s842
          %844 = dma.done %s840, 256
        $region64: #{tpu_custom_call.1} parent=59 // pred_fallthru
          _
      $region60: #{tpu_custom_call.1} parent=5 // pred_fallthru
        _
    $region6: #{tpu_custom_call.1} parent=1 // loop_footer
      %s22 = sadd.s32 1, %s18
    $region7: #{tpu_custom_call.1} parent=1 // loop_footer_branch
      %17 = sbr.rel target = $region3
    $region8: #{tpu_custom_call.1} parent=1 // loop_exit
      _
    %845 = vsyncpa [#allocation6], 1
    %s846 = scalar_lea.sflag [#allocation6], 1
    %847 = vsyncpa %s846, 1
    %848 = vsyncpa [#allocation9], 1
    %s849 = scalar_lea.sflag [#allocation9], 1
    %850 = vsyncpa %s849, 1
    %851 = vsyncpa [#allocation7], 1
    %s852 = scalar_lea.sflag [#allocation7], 1
    %853 = vsyncpa %s852, 1

</llo_original>
